<compile_context>
chip_gen: v5e
topology: v5e:2x2
jax: 0.10.0
libtpu: 0.0.40
codegen_flags: <defaults>
</compile_context>

<pallas_src>
import jax
import jax.numpy as jnp
from jax import lax
from jax.experimental import pallas as pl
from jax.experimental.pallas import tpu as pltpu


def edge_mlp_kernel(x_ref, w1_ref, b1_ref, w2_ref, b2_ref, o_ref):
    """One row-tile of edges through Linear -> ReLU -> Linear.

    x_ref : (tile_n, d_in)   edge features (dominant HBM stream)
    w1_ref: (d_in, hp)       layer-1 weights, hidden padded to hp (mult of 128)
    b1_ref: (1, hp)          layer-1 bias (padded with zeros)
    w2_ref: (8, hp)          layer-2 weights in row 0; rows 1..7 are zeros
    b2_ref: (1, 1)           layer-2 bias
    o_ref : (1, tile_n)      lane-dense row of edge scores
    """
    x = x_ref[...]                                                # (tile_n, d_in)
    # Layer 1 on the MXU, bias + ReLU on the VPU, all f32.
    h = jnp.dot(x, w1_ref[...], preferred_element_type=jnp.float32)
    h = jnp.maximum(h + b1_ref[...], 0.0)                         # (tile_n, hp)
    # Layer 2 oriented so scores come out lane-dense:
    #   s8[r, e] = sum_j w2[r, j] * h[e, j]   (trans-B matmul; row 0 is the score)
    s8 = lax.dot_general(
        w2_ref[...], h,
        dimension_numbers=(((1,), (1,)), ((), ())),
        preferred_element_type=jnp.float32)                       # (8, tile_n)
    o_ref[...] = (s8[0:1, :] + b2_ref[...]).astype(o_ref.dtype)   # (1, tile_n)


def edge_scoring_mlp(edge_features, w1, b1, w2, b2, *, tile_n=2048):
    """edge_features: (N, embed_dim*2+3) -> scores (N,).

    tile_n = edges per grid step.  Sweep 1024-8192 for large N; bigger tiles
    amortize the ~0.35us/step pipeline overhead (x block is ~tile_n*128*4 B in
    VMEM once lane-padded, well under the scoped VMEM limit at 2048).
    """
    n, d_in = edge_features.shape
    hidden = w1.shape[1]
    out_dtype = edge_features.dtype

    # --- Pad hidden to full 128-lane vregs (zero columns are exact no-ops). ----
    hp = ((hidden + 127) // 128) * 128
    pad_h = hp - hidden
    w1p = jnp.pad(w1, ((0, 0), (0, pad_h)))                        # (d_in, hp)
    b1p = jnp.pad(b1.reshape(1, hidden), ((0, 0), (0, pad_h)))     # (1, hp)
    # Layer-2 weights as a row, padded to 8 sublane rows (rows 1..7 zero).
    w2p = jnp.pad(w2.reshape(1, hidden), ((0, 7), (0, pad_h)))     # (8, hp)
    b2p = b2.reshape(1, 1)

    # --- Choose row tile and pad N so the grid divides evenly. -----------------
    tile_n = max(128, (tile_n // 128) * 128)        # multiple of 128
    n_up = ((n + 127) // 128) * 128
    tile_n = min(tile_n, n_up)                      # don't over-pad tiny inputs
    n_pad = ((n + tile_n - 1) // tile_n) * tile_n
    x = edge_features
    if n_pad != n:
        x = jnp.pad(x, ((0, n_pad - n), (0, 0)))

    grid = (n_pad // tile_n,)

    out = pl.pallas_call(
        edge_mlp_kernel,
        out_shape=jax.ShapeDtypeStruct((1, n_pad), out_dtype),
        grid_spec=pltpu.PrefetchScalarGridSpec(
            num_scalar_prefetch=0,
            grid=grid,
            in_specs=[
                # Row tile of edge features.
                pl.BlockSpec((tile_n, d_in), lambda i: (i, 0)),
                # Weights / biases: tiny (~tens of KB), resident for every tile.
                pl.BlockSpec((d_in, hp), lambda i: (0, 0)),
                pl.BlockSpec((1, hp), lambda i: (0, 0)),
                pl.BlockSpec((8, hp), lambda i: (0, 0)),
                pl.BlockSpec((1, 1), lambda i: (0, 0)),
            ],
            # Lane-dense output: each step writes a contiguous tile_n-wide slab
            # of the (1, n_pad) score row (no 1-of-128-lane masked stores).
            out_specs=pl.BlockSpec((1, tile_n), lambda i: (0, i)),
        ),
        compiler_params=pltpu.CompilerParams(
            dimension_semantics=("parallel",),   # shards grid across TCs on v7x
        ),
    )(x, w1p, b1p, w2p, b2p)

    # squeeze(-1) from the PyTorch forward + drop the row padding.
    return out[0, :n]


def init_params(key, embed_dim, hidden_dim=64, dtype=jnp.float32):
    """Deterministic init mimicking nn.Linear default (uniform(+-1/sqrt(fan_in)))."""
    d_in = embed_dim * 2 + 3
    k1, k2, k3, k4 = jax.random.split(key, 4)
    lim1 = 1.0 / jnp.sqrt(jnp.array(d_in, dtype))
    lim2 = 1.0 / jnp.sqrt(jnp.array(hidden_dim, dtype))
    w1 = jax.random.uniform(k1, (d_in, hidden_dim), dtype, -lim1, lim1)
    b1 = jax.random.uniform(k2, (hidden_dim,), dtype, -lim1, lim1)
    w2 = jax.random.uniform(k3, (hidden_dim, 1), dtype, -lim2, lim2)
    b2 = jax.random.uniform(k4, (1,), dtype, -lim2, lim2)
    return w1, b1, w2, b2


if __name__ == "__main__":
    embed_dim = 16
    hidden_dim = 64
    num_edges = 200            # deliberately NOT a multiple of 128: exercises padding
    d_in = embed_dim * 2 + 3   # 35

    key = jax.random.PRNGKey(0)
    k_params, k_x = jax.random.split(key)

    w1, b1, w2, b2 = init_params(k_params, embed_dim, hidden_dim)
    edge_features = jax.random.normal(k_x, (num_edges, d_in), jnp.float32)

    scores = edge_scoring_mlp(edge_features, w1, b1, w2, b2)
    scores = jax.block_until_ready(scores)

    # Pure-JAX reference check.
    ref = jnp.maximum(edge_features @ w1 + b1, 0.0) @ w2 + b2.reshape(1, 1)
    ref = ref[:, 0]
    assert scores.shape == (num_edges,)
    assert jnp.allclose(scores, ref, atol=1e-4, rtol=1e-4), "mismatch vs reference"

    print("KERNEL_OK")
</pallas_src>

<mosaic_0001>
module attributes {stable_mosaic.version = 11 : i64} {
  func.func @edge_mlp_kernel(%arg0: i32, %arg1: memref<256x35xf32, #tpu.memory_space<vmem>>, %arg2: memref<35x128xf32, #tpu.memory_space<vmem>>, %arg3: memref<1x128xf32, #tpu.memory_space<vmem>>, %arg4: memref<8x128xf32, #tpu.memory_space<vmem>>, %arg5: memref<1x1xf32, #tpu.memory_space<vmem>>, %arg6: memref<1x256xf32, #tpu.memory_space<vmem>>) attributes {dimension_semantics = [#tpu.dimension_semantics<parallel>], iteration_bounds = array<i64: 1>, scalar_prefetch = 0 : i64, scratch_operands = 0 : i64, tpu.core_type = #tpu.core_type<tc>, window_params = [{transform_indices = @transform_0, window_bounds = array<i64: 256, 35>}, {pipeline_mode = #tpu.pipeline_mode<synchronous>, transform_indices = @transform_1, window_bounds = array<i64: 35, 128>}, {pipeline_mode = #tpu.pipeline_mode<synchronous>, transform_indices = @transform_2, window_bounds = array<i64: 1, 128>}, {pipeline_mode = #tpu.pipeline_mode<synchronous>, transform_indices = @transform_3, window_bounds = array<i64: 8, 128>}, {pipeline_mode = #tpu.pipeline_mode<synchronous>, transform_indices = @transform_4, window_bounds = array<i64: 1, 1>}, {transform_indices = @transform_5, window_bounds = array<i64: 1, 256>}]} {
    %c0 = arith.constant 0 : index
    %c0_0 = arith.constant 0 : index
    %0 = vector.load %arg1[%c0, %c0_0] : memref<256x35xf32, #tpu.memory_space<vmem>>, vector<256x35xf32>
    %c0_1 = arith.constant 0 : index
    %c0_2 = arith.constant 0 : index
    %1 = vector.load %arg2[%c0_1, %c0_2] : memref<35x128xf32, #tpu.memory_space<vmem>>, vector<35x128xf32>
    %cst = arith.constant dense<0.000000e+00> : vector<256x128xf32>
    %2 = tpu.matmul %0, %1, %cst {dimension_numbers = #tpu.dot_dimension_numbers<[1], [0], [0], [1], [0, 0, 1, 1], [], []>} : vector<256x35xf32>, vector<35x128xf32>, vector<256x128xf32> -> vector<256x128xf32>
    %c0_3 = arith.constant 0 : index
    %c0_4 = arith.constant 0 : index
    %3 = vector.load %arg3[%c0_3, %c0_4] : memref<1x128xf32, #tpu.memory_space<vmem>>, vector<1x128xf32>
    %4 = vector.broadcast %3 : vector<1x128xf32> to vector<256x128xf32>
    %5 = arith.addf %2, %4 : vector<256x128xf32>
    %cst_5 = arith.constant 0.000000e+00 : f32
    %6 = vector.broadcast %cst_5 : f32 to vector<256x128xf32>
    %7 = arith.maximumf %5, %6 : vector<256x128xf32>
    %c0_6 = arith.constant 0 : index
    %c0_7 = arith.constant 0 : index
    %8 = vector.load %arg4[%c0_6, %c0_7] : memref<8x128xf32, #tpu.memory_space<vmem>>, vector<8x128xf32>
    %cst_8 = arith.constant dense<0.000000e+00> : vector<8x256xf32>
    %9 = tpu.matmul %8, %7, %cst_8 {dimension_numbers = #tpu.dot_dimension_numbers<[1], [1], [0], [0], [0, 0, 1, 0], [], []>} : vector<8x128xf32>, vector<256x128xf32>, vector<8x256xf32> -> vector<8x256xf32>
    %10 = vector.extract_strided_slice %9 {offsets = [0, 0], sizes = [1, 256], strides = [1, 1]} : vector<8x256xf32> to vector<1x256xf32>
    %c0_9 = arith.constant 0 : index
    %c0_10 = arith.constant 0 : index
    %11 = vector.load %arg5[%c0_9, %c0_10] : memref<1x1xf32, #tpu.memory_space<vmem>>, vector<1x1xf32>
    %12 = vector.broadcast %11 : vector<1x1xf32> to vector<1x256xf32>
    %13 = arith.addf %10, %12 : vector<1x256xf32>
    %c0_11 = arith.constant 0 : index
    %c0_12 = arith.constant 0 : index
    %14 = vector.load %arg6[%c0_11, %c0_12] : memref<1x256xf32, #tpu.memory_space<vmem>>, vector<1x256xf32>
    tpu.vector_store %arg6[%c0_11, %c0_12], %13 {strides = array<i32>} : memref<1x256xf32, #tpu.memory_space<vmem>>, vector<1x256xf32>,
    return
  }
  func.func @transform_0(%arg0: i32) -> (i32, i32) {
    %c0_i32 = arith.constant 0 : i32
    %c0_i32_0 = arith.constant 0 : i32
    return %arg0, %c0_i32 : i32, i32
  }
  func.func @transform_1(%arg0: i32) -> (i32, i32) {
    %c0_i32 = arith.constant 0 : i32
    %c0_i32_0 = arith.constant 0 : i32
    %c0_i32_1 = arith.constant 0 : i32
    return %c0_i32, %c0_i32_0 : i32, i32
  }
  func.func @transform_2(%arg0: i32) -> (i32, i32) {
    %c0_i32 = arith.constant 0 : i32
    %c0_i32_0 = arith.constant 0 : i32
    %c0_i32_1 = arith.constant 0 : i32
    return %c0_i32, %c0_i32_0 : i32, i32
  }
  func.func @transform_3(%arg0: i32) -> (i32, i32) {
    %c0_i32 = arith.constant 0 : i32
    %c0_i32_0 = arith.constant 0 : i32
    %c0_i32_1 = arith.constant 0 : i32
    return %c0_i32, %c0_i32_0 : i32, i32
  }
  func.func @transform_4(%arg0: i32) -> (i32, i32) {
    %c0_i32 = arith.constant 0 : i32
    %c0_i32_0 = arith.constant 0 : i32
    %c0_i32_1 = arith.constant 0 : i32
    return %c0_i32, %c0_i32_0 : i32, i32
  }
  func.func @transform_5(%arg0: i32) -> (i32, i32) {
    %c0_i32 = arith.constant 0 : i32
    %c0_i32_0 = arith.constant 0 : i32
    return %c0_i32, %arg0 : i32, i32
  }
}

</mosaic_0001>

<llo_original>
// kernel: tpu_custom_call.1
$region0: #{tpu_custom_call.1}
  #allocation0 [shape = 'u32[]', space=smem, size = 0x4, offset = 0x4, fixed_abs, tag = 'smem constant byte address 0x4 - core index']
  #allocation1 [shape = 'u32[72,128]{1,0:T(1,128)}', space=vmem, size = 0x9000, scoped, tag = 'internal scratch']
  #allocation2 [shape = 'f32[1,1]{1,0:T(1,128)S(1)}', space=vmem, size = 0x200, scoped, tag = 'scoped memory for tpu_custom_call.1']
  %s0 = inlined_call_operand.vmem [shape: f32[256,35], index: 0, kind: input, shape index: {}]
  %s1 = inlined_call_operand.vmem [shape: f32[35,128], index: 1, kind: input, shape index: {}]
  %s2 = inlined_call_operand.vmem [shape: f32[1,128], index: 2, kind: input, shape index: {}]
  %s3 = inlined_call_operand.vmem [shape: f32[8,128], index: 3, kind: input, shape index: {}]
  %s4 = inlined_call_operand.<no memory space> [shape: f32[1,1], index: 4, kind: input, shape index: {}]
  %s5 = inlined_call_operand.hbm [shape: f32[1,256], index: 5, kind: output, shape index: {}]
  %s6 = sld [smem:[#allocation0]]
  $region30: #{tpu_custom_call.1} parent=0
    _
  %s8 = ssub.s32 1, %s6
  %s9 = scalar_select 0, %s8, %s6
  %v10 = vstv %s4
  %11 = vst [vmem:[#allocation2] sm:$0x1] %v10
  $region1: #{tpu_custom_call.1} parent=0
    #allocation3 [shape = 'u8[1024]{0}', space=vmem, size = 0x400, scoped, tag = 'output window, operand 0, single buffered']
    #allocation4 [shape = 's32[1]{0}', space=sflag, size = 0x4, scoped, tag = 'scoped memory for tpu_custom_call.1']
    %12 = vsyncpa [#allocation4], 0
    // Predicated region
    $region2: #{tpu_custom_call.1} parent=1 // pred_check
      _
    $region3: #{tpu_custom_call.1} parent=1 // pred_check_branch
      %14 = sbr.rel (0) target = $region5
    $region4: #{tpu_custom_call.1} parent=1 // pred_region
      _
    $region5: #{tpu_custom_call.1} parent=1 // pred_fallthru
      _
    // Predicated region
    $region6: #{tpu_custom_call.1} parent=1 // pred_check
      _
    $region7: #{tpu_custom_call.1} parent=1 // pred_check_branch
      %16 = sbr.rel (0) target = $region9
    $region8: #{tpu_custom_call.1} parent=1 // pred_region
      _
    $region9: #{tpu_custom_call.1} parent=1 // pred_fallthru
      _
    // Predicated region
    $region10: #{tpu_custom_call.1} parent=1 // pred_check
      _
    $region11: #{tpu_custom_call.1} parent=1 // pred_check_branch
      %18 = sbr.rel (0) target = $region13
    $region12: #{tpu_custom_call.1} parent=1 // pred_region
      _
    $region13: #{tpu_custom_call.1} parent=1 // pred_fallthru
      _
    // Predicated region
    $region14: #{tpu_custom_call.1} parent=1 // pred_check
      _
    $region15: #{tpu_custom_call.1} parent=1 // pred_check_branch
      %20 = sbr.rel (0) target = $region17
    $region16: #{tpu_custom_call.1} parent=1 // pred_region
      _
    $region17: #{tpu_custom_call.1} parent=1 // pred_fallthru
      _
    // Predicated region
    $region18: #{tpu_custom_call.1} parent=1 // pred_check
      _
    $region19: #{tpu_custom_call.1} parent=1 // pred_check_branch
      %22 = sbr.rel (0) target = $region21
    $region20: #{tpu_custom_call.1} parent=1 // pred_region
      _
    $region21: #{tpu_custom_call.1} parent=1 // pred_fallthru
      _
    %v23 = vld [vmem:[%s0] sm:$0xff]
    %v24 = vld [vmem:[%s0 + $0x8] sm:$0xff]
    %v25 = vld [vmem:[%s0 + $0x10] sm:$0xff]
    %v26 = vld [vmem:[%s0 + $0x18] sm:$0xff]
    %v27 = vld [vmem:[%s0 + $0x20] sm:$0xff]
    %v28 = vld [vmem:[%s0 + $0x28] sm:$0xff]
    %v29 = vld [vmem:[%s0 + $0x30] sm:$0xff]
    %v30 = vld [vmem:[%s0 + $0x38] sm:$0xff]
    %v31 = vld [vmem:[%s0 + $0x40] sm:$0xff]
    %v32 = vld [vmem:[%s0 + $0x48] sm:$0xff]
    %v33 = vld [vmem:[%s0 + $0x50] sm:$0xff]
    %v34 = vld [vmem:[%s0 + $0x58] sm:$0xff]
    %v35 = vld [vmem:[%s0 + $0x60] sm:$0xff]
    %v36 = vld [vmem:[%s0 + $0x68] sm:$0xff]
    %v37 = vld [vmem:[%s0 + $0x70] sm:$0xff]
    %v38 = vld [vmem:[%s0 + $0x78] sm:$0xff]
    %v39 = vld [vmem:[%s0 + $0x80] sm:$0xff]
    %v40 = vld [vmem:[%s0 + $0x88] sm:$0xff]
    %v41 = vld [vmem:[%s0 + $0x90] sm:$0xff]
    %v42 = vld [vmem:[%s0 + $0x98] sm:$0xff]
    %v43 = vld [vmem:[%s0 + $0xa0] sm:$0xff]
    %v44 = vld [vmem:[%s0 + $0xa8] sm:$0xff]
    %v45 = vld [vmem:[%s0 + $0xb0] sm:$0xff]
    %v46 = vld [vmem:[%s0 + $0xb8] sm:$0xff]
    %v47 = vld [vmem:[%s0 + $0xc0] sm:$0xff]
    %v48 = vld [vmem:[%s0 + $0xc8] sm:$0xff]
    %v49 = vld [vmem:[%s0 + $0xd0] sm:$0xff]
    %v50 = vld [vmem:[%s0 + $0xd8] sm:$0xff]
    %v51 = vld [vmem:[%s0 + $0xe0] sm:$0xff]
    %v52 = vld [vmem:[%s0 + $0xe8] sm:$0xff]
    %v53 = vld [vmem:[%s0 + $0xf0] sm:$0xff]
    %v54 = vld [vmem:[%s0 + $0xf8] sm:$0xff]
    %v55 = vld [vmem:[%s1] sm:$0xff]
    %v56 = vld [vmem:[%s1 + $0x8] sm:$0xff]
    %v57 = vld [vmem:[%s1 + $0x10] sm:$0xff]
    %v58 = vld [vmem:[%s1 + $0x18] sm:$0xff]
    %v59 = vld [vmem:[%s1 + $0x20] sm:$0x7]
    %v60 = vld [vmem:[%s2] sm:$0x1]
    %v62 = vperm.slane %v60, 0
    %vm64 = vcmask 285696
    %v66 = vsel %vm64, %v23, 0
    %v69 = vsel %vm64, %v24, 0
    %v72 = vsel %vm64, %v25, 0
    %v75 = vsel %vm64, %v26, 0
    %v78 = vsel %vm64, %v27, 0
    %v81 = vsel %vm64, %v28, 0
    %v84 = vsel %vm64, %v29, 0
    %v87 = vsel %vm64, %v30, 0
    %v90 = vsel %vm64, %v31, 0
    %v93 = vsel %vm64, %v32, 0
    %v96 = vsel %vm64, %v33, 0
    %v99 = vsel %vm64, %v34, 0
    %v102 = vsel %vm64, %v35, 0
    %v105 = vsel %vm64, %v36, 0
    %v108 = vsel %vm64, %v37, 0
    %v111 = vsel %vm64, %v38, 0
    %v114 = vsel %vm64, %v39, 0
    %v117 = vsel %vm64, %v40, 0
    %v120 = vsel %vm64, %v41, 0
    %v123 = vsel %vm64, %v42, 0
    %v126 = vsel %vm64, %v43, 0
    %v129 = vsel %vm64, %v44, 0
    %v132 = vsel %vm64, %v45, 0
    %v135 = vsel %vm64, %v46, 0
    %v138 = vsel %vm64, %v47, 0
    %v141 = vsel %vm64, %v48, 0
    %v144 = vsel %vm64, %v49, 0
    %v147 = vsel %vm64, %v50, 0
    %v150 = vsel %vm64, %v51, 0
    %v153 = vsel %vm64, %v52, 0
    %v156 = vsel %vm64, %v53, 0
    %v159 = vsel %vm64, %v54, 0
    %vm161 = vcmask 1042432
    %v163 = vsel %vm161, %v59, 0
    %165 = vmatpush.msra.mxu0 0.0
    %166 = vmatpush.msra.mxu0 0.0
    %167 = vmatpush.msra.mxu0 0.0
    %168 = vmatpush.msra.mxu0 0.0
    %169 = vmatpush.msra.mxu0 0.0
    %170 = vmatpush.msra.mxu0 0.0
    %171 = vmatpush.msra.mxu0 0.0
    %172 = vmatpush.msra.mxu0 0.0
    %173 = vmatpush.msra.mxu0 0.0
    %174 = vmatpush.msra.mxu0 0.0
    %175 = vmatpush.msra.mxu0 0.0
    %176 = vmatpush.msra.mxu0 %v163
    %177 = vmatpush.msra.mxu0 %v58
    %178 = vmatpush.msra.mxu0 %v57
    %179 = vmatpush.msra.mxu0 %v56
    %180 = vmatpush.msra.mxu0 %v55
    %181 = vmatmul.f32.gmra.mxu0 %v66
    %v182 = vpop.f32.mrf.mxu0
    %v183 = vadd.f32 %v62, %v182
    %184 = vmatmul.f32.gmra.mxu0 %v69
    %v185 = vpop.f32.mrf.mxu0
    %v186 = vadd.f32 %v62, %v185
    %187 = vmatmul.f32.gmra.mxu0 %v72
    %v188 = vpop.f32.mrf.mxu0
    %v189 = vadd.f32 %v62, %v188
    %190 = vmatmul.f32.gmra.mxu0 %v75
    %v191 = vpop.f32.mrf.mxu0
    %v192 = vadd.f32 %v62, %v191
    %193 = vmatmul.f32.gmra.mxu0 %v78
    %v194 = vpop.f32.mrf.mxu0
    %v195 = vadd.f32 %v62, %v194
    %196 = vmatmul.f32.gmra.mxu0 %v81
    %v197 = vpop.f32.mrf.mxu0
    %v198 = vadd.f32 %v62, %v197
    %199 = vmatmul.f32.gmra.mxu0 %v84
    %v200 = vpop.f32.mrf.mxu0
    %v201 = vadd.f32 %v62, %v200
    %202 = vmatmul.f32.gmra.mxu0 %v87
    %v203 = vpop.f32.mrf.mxu0
    %v204 = vadd.f32 %v62, %v203
    %205 = vmatmul.f32.gmra.mxu0 %v90
    %v206 = vpop.f32.mrf.mxu0
    %v207 = vadd.f32 %v62, %v206
    %208 = vmatmul.f32.gmra.mxu0 %v93
    %v209 = vpop.f32.mrf.mxu0
    %v210 = vadd.f32 %v62, %v209
    %211 = vmatmul.f32.gmra.mxu0 %v96
    %v212 = vpop.f32.mrf.mxu0
    %v213 = vadd.f32 %v62, %v212
    %214 = vmatmul.f32.gmra.mxu0 %v99
    %v215 = vpop.f32.mrf.mxu0
    %v216 = vadd.f32 %v62, %v215
    %217 = vmatmul.f32.gmra.mxu0 %v102
    %v218 = vpop.f32.mrf.mxu0
    %v219 = vadd.f32 %v62, %v218
    %220 = vmatmul.f32.gmra.mxu0 %v105
    %v221 = vpop.f32.mrf.mxu0
    %v222 = vadd.f32 %v62, %v221
    %223 = vmatmul.f32.gmra.mxu0 %v108
    %v224 = vpop.f32.mrf.mxu0
    %v225 = vadd.f32 %v62, %v224
    %226 = vmatmul.f32.gmra.mxu0 %v111
    %v227 = vpop.f32.mrf.mxu0
    %v228 = vadd.f32 %v62, %v227
    %229 = vmatmul.f32.gmra.mxu0 %v114
    %v230 = vpop.f32.mrf.mxu0
    %v231 = vadd.f32 %v62, %v230
    %232 = vmatmul.f32.gmra.mxu0 %v117
    %v233 = vpop.f32.mrf.mxu0
    %v234 = vadd.f32 %v62, %v233
    %235 = vmatmul.f32.gmra.mxu0 %v120
    %v236 = vpop.f32.mrf.mxu0
    %v237 = vadd.f32 %v62, %v236
    %238 = vmatmul.f32.gmra.mxu0 %v123
    %v239 = vpop.f32.mrf.mxu0
    %v240 = vadd.f32 %v62, %v239
    %241 = vmatmul.f32.gmra.mxu0 %v126
    %v242 = vpop.f32.mrf.mxu0
    %v243 = vadd.f32 %v62, %v242
    %244 = vmatmul.f32.gmra.mxu0 %v129
    %v245 = vpop.f32.mrf.mxu0
    %v246 = vadd.f32 %v62, %v245
    %247 = vmatmul.f32.gmra.mxu0 %v132
    %v248 = vpop.f32.mrf.mxu0
    %v249 = vadd.f32 %v62, %v248
    %250 = vmatmul.f32.gmra.mxu0 %v135
    %v251 = vpop.f32.mrf.mxu0
    %v252 = vadd.f32 %v62, %v251
    %253 = vmatmul.f32.gmra.mxu0 %v138
    %v254 = vpop.f32.mrf.mxu0
    %v255 = vadd.f32 %v62, %v254
    %256 = vmatmul.f32.gmra.mxu0 %v141
    %v257 = vpop.f32.mrf.mxu0
    %v258 = vadd.f32 %v62, %v257
    %259 = vmatmul.f32.gmra.mxu0 %v144
    %v260 = vpop.f32.mrf.mxu0
    %v261 = vadd.f32 %v62, %v260
    %262 = vmatmul.f32.gmra.mxu0 %v147
    %v263 = vpop.f32.mrf.mxu0
    %v264 = vadd.f32 %v62, %v263
    %265 = vmatmul.f32.gmra.mxu0 %v150
    %v266 = vpop.f32.mrf.mxu0
    %v267 = vadd.f32 %v62, %v266
    %268 = vmatmul.f32.gmra.mxu0 %v153
    %v269 = vpop.f32.mrf.mxu0
    %v270 = vadd.f32 %v62, %v269
    %271 = vmatmul.f32.gmra.mxu0 %v156
    %v272 = vpop.f32.mrf.mxu0
    %v273 = vadd.f32 %v62, %v272
    %274 = vmatmul.f32.gmra.mxu0 %v159
    %v275 = vpop.f32.mrf.mxu0
    %v276 = vadd.f32 %v62, %v275
    %277 = vdwg.mxu0
    %v278 = vmax.f32 %v183, 0.0
    %v279 = vmax.f32 %v186, 0.0
    %v280 = vmax.f32 %v189, 0.0
    %v281 = vmax.f32 %v192, 0.0
    %v282 = vmax.f32 %v195, 0.0
    %v283 = vmax.f32 %v198, 0.0
    %v284 = vmax.f32 %v201, 0.0
    %v285 = vmax.f32 %v204, 0.0
    %v286 = vmax.f32 %v207, 0.0
    %v287 = vmax.f32 %v210, 0.0
    %v288 = vmax.f32 %v213, 0.0
    %v289 = vmax.f32 %v216, 0.0
    %v290 = vmax.f32 %v219, 0.0
    %v291 = vmax.f32 %v222, 0.0
    %v292 = vmax.f32 %v225, 0.0
    %v293 = vmax.f32 %v228, 0.0
    %v294 = vmax.f32 %v231, 0.0
    %v295 = vmax.f32 %v234, 0.0
    %v296 = vmax.f32 %v237, 0.0
    %v297 = vmax.f32 %v240, 0.0
    %v298 = vmax.f32 %v243, 0.0
    %v299 = vmax.f32 %v246, 0.0
    %v300 = vmax.f32 %v249, 0.0
    %v301 = vmax.f32 %v252, 0.0
    %v302 = vmax.f32 %v255, 0.0
    %v303 = vmax.f32 %v258, 0.0
    %v304 = vmax.f32 %v261, 0.0
    %v305 = vmax.f32 %v264, 0.0
    %v306 = vmax.f32 %v267, 0.0
    %v307 = vmax.f32 %v270, 0.0
    %v308 = vmax.f32 %v273, 0.0
    %v309 = vmax.f32 %v276, 0.0
    %v310 = vld [vmem:[%s3] sm:$0xff]
    %311 = vmatpush.xpose.msra.mxu0 %v293
    %312 = vmatpush.xpose.msra.mxu0 %v292
    %313 = vmatpush.xpose.msra.mxu0 %v291
    %314 = vmatpush.xpose.msra.mxu0 %v290
    %315 = vmatpush.xpose.msra.mxu0 %v289
    %316 = vmatpush.xpose.msra.mxu0 %v288
    %317 = vmatpush.xpose.msra.mxu0 %v287
    %318 = vmatpush.xpose.msra.mxu0 %v286
    %319 = vmatpush.xpose.msra.mxu0 %v285
    %320 = vmatpush.xpose.msra.mxu0 %v284
    %321 = vmatpush.xpose.msra.mxu0 %v283
    %322 = vmatpush.xpose.msra.mxu0 %v282
    %323 = vmatpush.xpose.msra.mxu0 %v281
    %324 = vmatpush.xpose.msra.mxu0 %v280
    %325 = vmatpush.xpose.msra.mxu0 %v279
    %326 = vmatpush.xpose.msra.mxu0 %v278
    %327 = vmatmul.f32.gmra.mxu0 %v310
    %v328 = vpop.f32.mrf.mxu0
    %v329 = vadd.f32 0.0, %v328
    %330 = vdwg.mxu0
    %331 = vmatpush.xpose.msra.mxu0 %v309
    %332 = vmatpush.xpose.msra.mxu0 %v308
    %333 = vmatpush.xpose.msra.mxu0 %v307
    %334 = vmatpush.xpose.msra.mxu0 %v306
    %335 = vmatpush.xpose.msra.mxu0 %v305
    %336 = vmatpush.xpose.msra.mxu0 %v304
    %337 = vmatpush.xpose.msra.mxu0 %v303
    %338 = vmatpush.xpose.msra.mxu0 %v302
    %339 = vmatpush.xpose.msra.mxu0 %v301
    %340 = vmatpush.xpose.msra.mxu0 %v300
    %341 = vmatpush.xpose.msra.mxu0 %v299
    %342 = vmatpush.xpose.msra.mxu0 %v298
    %343 = vmatpush.xpose.msra.mxu0 %v297
    %344 = vmatpush.xpose.msra.mxu0 %v296
    %345 = vmatpush.xpose.msra.mxu0 %v295
    %346 = vmatpush.xpose.msra.mxu0 %v294
    %347 = vmatmul.f32.gmra.mxu0 %v310
    %v348 = vpop.f32.mrf.mxu0
    %v349 = vadd.f32 0.0, %v348
    %350 = vdwg.mxu0
    %v351 = vld [vmem:[#allocation2] sm:$0x1]
    %353 = vset.pattern.permute.xlu0 0
    %354 = vperm.xlu0 %353, %v351
    %v355 = vpop.permute.xlu0 %354
    %v357 = vperm.slane %v355, 0
    %v358 = vadd.f32 %v329, %v357
    %v359 = vadd.f32 %v349, %v357
    %v362 = vrot.slane %v359, 7
    %vm363 = vcmask 1040384
    %v364 = vsel %vm363, %v358, %v362
    %v366 = vlaneseq
    %vm367 = vcmp.ge.s32.totalorder %v366, 0
    %vm368 = vcmp.lt.s32.totalorder %v366, 256
    %vm369 = vmand %vm367, %vm368
    %370 = vst.msk [vmem:[#allocation3] sm:$0x3] %vm369, %v364
    // Predicated region
    $region22: #{tpu_custom_call.1} parent=1 // pred_check
      _
    $region23: #{tpu_custom_call.1} parent=1 // pred_check_branch
      %372 = sbr.rel (0) target = $region25
    $region24: #{tpu_custom_call.1} parent=1 // pred_region
      %374 = vsyncadd [#allocation4], 0
      %s376 = sshll.u32 [#allocation3], 4
      %s377 = int_to_ptr.vmem [resolvable:$true] %s376
      %s378 = sshll.u32 %s5, 4
      %s379 = int_to_ptr.hbm [resolvable:$true] %s378
      %381 = dma.vmem_to_hbm [thread:$0]  %s377, 32, %s379, [#allocation4]
    $region25: #{tpu_custom_call.1} parent=1 // pred_fallthru
      _
    // Predicated region
    $region26: #{tpu_custom_call.1} parent=1 // pred_check
      _
    $region27: #{tpu_custom_call.1} parent=1 // pred_check_branch
      %383 = sbr.rel (0) target = $region29
    $region28: #{tpu_custom_call.1} parent=1 // pred_region
      %385 = dma.done [#allocation4], 32
    $region29: #{tpu_custom_call.1} parent=1 // pred_fallthru
      _
    %386 = vsyncpa [#allocation4], 1

</llo_original>
